<compile_context>
chip_gen: v5e
topology: v5e:2x2
jax: 0.10.0
libtpu: 0.0.40
codegen_flags: <defaults>
</compile_context>

<pallas_src>
import jax
import jax.numpy as jnp
from jax import lax
from jax.experimental import pallas as pl
from jax.experimental.pallas import tpu as pltpu


_CHUNK = 512          # lanes per inner-loop chunk: (H, 512) hidden tile stays in vregs
_MAX_BLOCK_N = 16384  # 32 chunks per grid step; amortizes per-step overhead


def _choose_block_n(n, *, min_grid=2):
    """Pick a lane-block size: big enough to bury the ~600-cycle per-grid-step
    overhead under EUP work, but small enough that the grid keeps >= min_grid
    steps (so v7x's two TensorCores both get a share of the 'parallel' axis)."""
    total_chunks = max(1, pl.cdiv(n, _CHUNK))
    chunks_per_block = max(1, pl.cdiv(total_chunks, min_grid))
    chunks_per_block = min(chunks_per_block, _MAX_BLOCK_N // _CHUNK)
    return chunks_per_block * _CHUNK


def _fitter_kernel(xt_ref, w1t_ref, b1_ref, w2_ref, b2_ref, zt_ref):
    """One lane-dense tile of the batch.

    xt_ref : (2, TN) f32  -- inputs, batch on the lane axis
    w1t_ref: (H, 2)  f32  -- fc1 weight (PyTorch layout)
    b1_ref : (H, 1)  f32  -- fc1 bias as a column
    w2_ref : (H, 1)  f32  -- fc2 weight as a column
    b2_ref : (1, 1)  f32  -- fc2 bias, scalar in SMEM
    zt_ref : (1, TN) f32  -- outputs, batch on the lane axis
    """
    H = w1t_ref.shape[0]
    bn = xt_ref.shape[1]
    n_chunks = bn // _CHUNK  # static: bn is a multiple of _CHUNK by construction

    # Hoist weight/bias loads and their broadcasts out of the chunk loop
    # (JAX does not CSE broadcast_in_dim; per-iteration re-broadcast would add
    # redundant VPU filler competing with the tanh pipeline).
    w1c0 = jnp.broadcast_to(w1t_ref[:, 0:1], (H, _CHUNK))   # (H, CHUNK)
    w1c1 = jnp.broadcast_to(w1t_ref[:, 1:2], (H, _CHUNK))   # (H, CHUNK)
    b1 = jnp.broadcast_to(b1_ref[...], (H, _CHUNK))         # (H, CHUNK)
    w2 = jnp.broadcast_to(w2_ref[...], (H, _CHUNK))         # (H, CHUNK)
    b2 = b2_ref[0, 0]                                       # scalar (SMEM)

    def body(c, carry):
        off = pl.multiple_of(c * _CHUNK, _CHUNK)
        x0 = xt_ref[0:1, pl.ds(off, _CHUNK)]                 # (1, CHUNK)
        x1 = xt_ref[1:2, pl.ds(off, _CHUNK)]                 # (1, CHUNK)
        # fc1 (K=2): two VPU broadcast-FMAs; tanh on the EUP.  The (H, CHUNK)
        # hidden tile (16 vregs at H=32) stays in registers -- no VMEM
        # round-trip between the tanh and the fc2 reduction.
        h = jnp.tanh(w1c0 * x0 + w1c1 * x1 + b1)             # (H, CHUNK)
        # fc2 (H -> 1): elementwise mul + sublane (XLU) reduce, f32 accumulate.
        z = jnp.sum(h * w2, axis=0, keepdims=True)           # (1, CHUNK)
        zt_ref[0:1, pl.ds(off, _CHUNK)] = z + b2
        return carry

    # Fully-unrolled fixed-trip-count inner loop (LLO scheduler visibility).
    lax.fori_loop(0, n_chunks, body, 0, unroll=True)


def fitter_forward(x, fc1_w, fc1_b, fc2_w, fc2_b, *, block_n=None):
    """Forward pass matching Fitter.forward.

    x     : (N, 2)  float
    fc1_w : (H, 2), fc1_b: (H,)   -- PyTorch nn.Linear(2, H) layout
    fc2_w : (1, H), fc2_b: (1,)   -- PyTorch nn.Linear(H, 1) layout
    returns (N, 1) float32
    """
    N = x.shape[0]
    H = fc1_w.shape[0]

    if block_n is None:
        bn = _choose_block_n(N)
    else:
        bn = max(_CHUNK, (int(block_n) // _CHUNK) * _CHUNK)  # multiple of the chunk
    n_pad = pl.cdiv(N, bn) * bn

    # Single pad in the natural (N, 2) layout, then transpose to lane-dense
    # (2, n_pad); XLA fuses the pad+transpose into one copy of the input.
    xt = jnp.pad(x.astype(jnp.float32), ((0, n_pad - N), (0, 0))).T   # (2, n_pad)
    w1t = fc1_w.astype(jnp.float32)                                    # (H, 2)
    b1c = fc1_b.reshape(H, 1).astype(jnp.float32)                      # (H, 1)
    w2c = fc2_w.reshape(H, 1).astype(jnp.float32)                      # (H, 1)
    b2s = fc2_b.reshape(1, 1).astype(jnp.float32)                      # (1, 1) -> SMEM

    zt = pl.pallas_call(
        _fitter_kernel,
        out_shape=jax.ShapeDtypeStruct((1, n_pad), jnp.float32),
        grid=(n_pad // bn,),
        in_specs=[
            pl.BlockSpec((2, bn), lambda i: (0, i)),        # stream x tiles
            pl.BlockSpec((H, 2), lambda i: (0, 0)),         # weights VMEM-resident
            pl.BlockSpec((H, 1), lambda i: (0, 0)),
            pl.BlockSpec((H, 1), lambda i: (0, 0)),
            pl.BlockSpec((1, 1), lambda i: (0, 0),
                         memory_space=pltpu.MemorySpace.SMEM),
        ],
        out_specs=pl.BlockSpec((1, bn), lambda i: (0, i)),  # lane-dense output
        compiler_params=pltpu.CompilerParams(
            dimension_semantics=("parallel",)),             # megacore shard on v7x
    )(xt, w1t, b1c, w2c, b2s)

    return zt[0, :N].reshape(N, 1)


def init_params(key, num_hidden_nodes):
    """Deterministic init mimicking torch.nn.Linear defaults (uniform +/- 1/sqrt(fan_in)),
    in PyTorch layouts: fc1_w (H,2), fc1_b (H,), fc2_w (1,H), fc2_b (1,)."""
    H = num_hidden_nodes
    k1, k2, k3, k4 = jax.random.split(key, 4)
    bound1 = 1.0 / jnp.sqrt(2.0)
    bound2 = 1.0 / jnp.sqrt(float(H))
    fc1_w = jax.random.uniform(k1, (H, 2), jnp.float32, -bound1, bound1)
    fc1_b = jax.random.uniform(k2, (H,), jnp.float32, -bound1, bound1)
    fc2_w = jax.random.uniform(k3, (1, H), jnp.float32, -bound2, bound2)
    fc2_b = jax.random.uniform(k4, (1,), jnp.float32, -bound2, bound2)
    return fc1_w, fc1_b, fc2_w, fc2_b


if __name__ == "__main__":
    key = jax.random.PRNGKey(0)
    k_x, k_x2, k_x3, k_p = jax.random.split(key, 4)

    H = 32  # num_hidden_nodes
    fc1_w, fc1_b, fc2_w, fc2_b = init_params(k_p, H)

    def reference(xx):
        return jnp.tanh(xx @ fc1_w.T + fc1_b) @ fc2_w.T + fc2_b

    # N = 1024 -> auto block_n = 512, grid of 2 (pipelined + megacore-parallel).
    x = jax.random.normal(k_x, (1024, 2), jnp.float32)
    z = fitter_forward(x, fc1_w, fc1_b, fc2_w, fc2_b)
    jax.block_until_ready(z)
    assert z.shape == (1024, 1)
    assert jnp.allclose(z, reference(x), atol=2e-5, rtol=2e-5)

    # Ragged batch (exercises the padding path; single grid step).
    x2 = jax.random.normal(k_x2, (200, 2), jnp.float32)
    z2 = fitter_forward(x2, fc1_w, fc1_b, fc2_w, fc2_b)
    jax.block_until_ready(z2)
    assert z2.shape == (200, 1)
    assert jnp.allclose(z2, reference(x2), atol=2e-5, rtol=2e-5)

    # N = 4096 -> auto block_n = 2048, grid of 2, inner loop of 4 x 512-lane chunks.
    x3 = jax.random.normal(k_x3, (4096, 2), jnp.float32)
    z3 = fitter_forward(x3, fc1_w, fc1_b, fc2_w, fc2_b)
    jax.block_until_ready(z3)
    assert z3.shape == (4096, 1)
    assert jnp.allclose(z3, reference(x3), atol=2e-5, rtol=2e-5)

    print("KERNEL_OK")
</pallas_src>

<mosaic_0001>
module attributes {stable_mosaic.version = 11 : i64} {
  func.func @_fitter_kernel(%arg0: i32, %arg1: memref<2x512xf32, #tpu.memory_space<vmem>>, %arg2: memref<32x2xf32, #tpu.memory_space<vmem>>, %arg3: memref<32x1xf32, #tpu.memory_space<vmem>>, %arg4: memref<32x1xf32, #tpu.memory_space<vmem>>, %arg5: memref<1x1xf32, #tpu.memory_space<smem>>, %arg6: memref<1x512xf32, #tpu.memory_space<vmem>>) attributes {dimension_semantics = [#tpu.dimension_semantics<parallel>], iteration_bounds = array<i64: 2>, scalar_prefetch = 0 : i64, scratch_operands = 0 : i64, tpu.core_type = #tpu.core_type<tc>, window_params = [{transform_indices = @transform_0, window_bounds = array<i64: 2, 512>}, {pipeline_mode = #tpu.pipeline_mode<synchronous>, transform_indices = @transform_1, window_bounds = array<i64: 32, 2>}, {pipeline_mode = #tpu.pipeline_mode<synchronous>, transform_indices = @transform_2, window_bounds = array<i64: 32, 1>}, {pipeline_mode = #tpu.pipeline_mode<synchronous>, transform_indices = @transform_3, window_bounds = array<i64: 32, 1>}, {transform_indices = @transform_4, window_bounds = array<i64: 1, 1>}, {transform_indices = @transform_5, window_bounds = array<i64: 1, 512>}]} {
    %c0 = arith.constant 0 : index
    %c0_0 = arith.constant 0 : index
    %0 = vector.load %arg2[%c0, %c0_0] : memref<32x2xf32, #tpu.memory_space<vmem>>, vector<32x1xf32>
    %1 = vector.shape_cast %0 : vector<32x1xf32> to vector<32x1xf32>
    %2 = vector.broadcast %1 : vector<32x1xf32> to vector<32x512xf32>
    %c0_1 = arith.constant 0 : index
    %c1 = arith.constant 1 : index
    %3 = vector.load %arg2[%c0_1, %c1] : memref<32x2xf32, #tpu.memory_space<vmem>>, vector<32x1xf32>
    %4 = vector.shape_cast %3 : vector<32x1xf32> to vector<32x1xf32>
    %5 = vector.broadcast %4 : vector<32x1xf32> to vector<32x512xf32>
    %c0_2 = arith.constant 0 : index
    %c0_3 = arith.constant 0 : index
    %6 = vector.load %arg3[%c0_2, %c0_3] : memref<32x1xf32, #tpu.memory_space<vmem>>, vector<32x1xf32>
    %7 = vector.shape_cast %6 : vector<32x1xf32> to vector<32x1xf32>
    %8 = vector.broadcast %7 : vector<32x1xf32> to vector<32x512xf32>
    %c0_4 = arith.constant 0 : index
    %c0_5 = arith.constant 0 : index
    %9 = vector.load %arg4[%c0_4, %c0_5] : memref<32x1xf32, #tpu.memory_space<vmem>>, vector<32x1xf32>
    %10 = vector.shape_cast %9 : vector<32x1xf32> to vector<32x1xf32>
    %11 = vector.broadcast %10 : vector<32x1xf32> to vector<32x512xf32>
    %c0_6 = arith.constant 0 : index
    %c0_7 = arith.constant 0 : index
    %12 = memref.load %arg5[%c0_6, %c0_7] : memref<1x1xf32, #tpu.memory_space<smem>>
    %c0_i32 = arith.constant 0 : i32
    %c512_i32 = arith.constant 512 : i32
    %13 = arith.muli %c0_i32, %c512_i32 : i32
    %14 = tpu.assume_multiple %13, 512 : i32
    %c0_8 = arith.constant 0 : index
    %15 = arith.index_cast %14 : i32 to index
    %16 = vector.load %arg1[%c0_8, %15] : memref<2x512xf32, #tpu.memory_space<vmem>>, vector<1x512xf32>
    %c1_9 = arith.constant 1 : index
    %17 = arith.index_cast %14 : i32 to index
    %18 = vector.load %arg1[%c1_9, %17] : memref<2x512xf32, #tpu.memory_space<vmem>>, vector<1x512xf32>
    %19 = vector.broadcast %16 : vector<1x512xf32> to vector<32x512xf32>
    %20 = arith.mulf %2, %19 : vector<32x512xf32>
    %21 = vector.broadcast %18 : vector<1x512xf32> to vector<32x512xf32>
    %22 = arith.mulf %5, %21 : vector<32x512xf32>
    %23 = arith.addf %20, %22 : vector<32x512xf32>
    %24 = arith.addf %23, %8 : vector<32x512xf32>
    %25 = math.tanh %24 : vector<32x512xf32>
    %26 = arith.mulf %25, %11 : vector<32x512xf32>
    %cst = arith.constant dense<0.000000e+00> : vector<512xf32>
    %27 = vector.multi_reduction <add>, %26, %cst [0] : vector<32x512xf32> to vector<512xf32>
    %28 = vector.shape_cast %27 : vector<512xf32> to vector<1x512xf32>
    %29 = vector.broadcast %12 : f32 to vector<1x512xf32>
    %30 = arith.addf %28, %29 : vector<1x512xf32>
    %c0_10 = arith.constant 0 : index
    %31 = arith.index_cast %14 : i32 to index
    %32 = vector.load %arg6[%c0_10, %31] : memref<1x512xf32, #tpu.memory_space<vmem>>, vector<1x512xf32>
    tpu.vector_store %arg6[%c0_10, %31], %30 {strides = array<i32>} : memref<1x512xf32, #tpu.memory_space<vmem>>, vector<1x512xf32>,
    %c1_i32 = arith.constant 1 : i32
    return
  }
  func.func @transform_0(%arg0: i32) -> (i32, i32) {
    %c0_i32 = arith.constant 0 : i32
    %c0_i32_0 = arith.constant 0 : i32
    return %c0_i32, %arg0 : i32, i32
  }
  func.func @transform_1(%arg0: i32) -> (i32, i32) {
    %c0_i32 = arith.constant 0 : i32
    %c0_i32_0 = arith.constant 0 : i32
    %c0_i32_1 = arith.constant 0 : i32
    return %c0_i32, %c0_i32_0 : i32, i32
  }
  func.func @transform_2(%arg0: i32) -> (i32, i32) {
    %c0_i32 = arith.constant 0 : i32
    %c0_i32_0 = arith.constant 0 : i32
    %c0_i32_1 = arith.constant 0 : i32
    return %c0_i32, %c0_i32_0 : i32, i32
  }
  func.func @transform_3(%arg0: i32) -> (i32, i32) {
    %c0_i32 = arith.constant 0 : i32
    %c0_i32_0 = arith.constant 0 : i32
    %c0_i32_1 = arith.constant 0 : i32
    return %c0_i32, %c0_i32_0 : i32, i32
  }
  func.func @transform_4(%arg0: i32) -> (i32, i32) {
    %c0_i32 = arith.constant 0 : i32
    %c0_i32_0 = arith.constant 0 : i32
    %c0_i32_1 = arith.constant 0 : i32
    return %c0_i32, %c0_i32_0 : i32, i32
  }
  func.func @transform_5(%arg0: i32) -> (i32, i32) {
    %c0_i32 = arith.constant 0 : i32
    %c0_i32_0 = arith.constant 0 : i32
    return %c0_i32, %arg0 : i32, i32
  }
}

</mosaic_0001>

<llo_original>
// kernel: tpu_custom_call.1
$region0: #{tpu_custom_call.1}
  #allocation0 [shape = 'u32[]', space=smem, size = 0x4, offset = 0x4, fixed_abs, tag = 'smem constant byte address 0x4 - core index']
  #allocation1 [shape = 'u32[72,128]{1,0:T(1,128)}', space=vmem, size = 0x9000, scoped, tag = 'internal scratch']
  #allocation2 [shape = 'f32[1,1]{1,0:T(1,128)S(6)}', space=smem, size = 0x200, scoped, tag = 'scoped memory for tpu_custom_call.1']
  %s0 = inlined_call_operand.vmem [shape: f32[2,1024], index: 0, kind: input, shape index: {}]
  %s1 = inlined_call_operand.vmem [shape: f32[32,2], index: 1, kind: input, shape index: {}]
  %s2 = inlined_call_operand.vmem [shape: f32[32,1], index: 2, kind: input, shape index: {}]
  %s3 = inlined_call_operand.vmem [shape: f32[32,1], index: 3, kind: input, shape index: {}]
  %s4 = inlined_call_operand.<no memory space> [shape: f32[1,1], index: 4, kind: input, shape index: {}]
  %s5 = inlined_call_operand.hbm [shape: f32[1,1024], index: 5, kind: output, shape index: {}]
  %s6 = sld [smem:[#allocation0]]
  $region53: #{tpu_custom_call.1} parent=0
    _
  %s8 = ssub.s32 1, %s6
  %s9 = scalar_select 0, %s8, %s6
  %10 = sst [smem:[#allocation2]] %s4
  $region1: #{tpu_custom_call.1} parent=0
    #allocation3 [shape = 'u8[4096]{0}', space=vmem, size = 0x1000, scoped, tag = 'output window, operand 0']
    #allocation4 [shape = 's32[2]{0}', space=sflag, size = 0x8, scoped, tag = 'scoped memory for tpu_custom_call.1']
    %11 = vsyncpa [#allocation4], 0
    %s12 = scalar_lea.sflag [#allocation4], 1
    %13 = vsyncpa %s12, 0
    loop: start=0, step=1, limit=4
    $region2: #{tpu_custom_call.1} parent=1 // loop_pre_header
      _
    $region3: #{tpu_custom_call.1} parent=1 // loop_header
      %s15 = sphi 0, %s19
      %p16 = scmp.ge.s32.totalorder %s15, 4
      %s25 = sphi 0, %s27
      %s28 = sphi 0, %s25
      %s29 = sphi 0, %s28
      %s45 = sphi 0, %s29
      %s49 = sphi 0, %s49
      %s51 = sphi 0, %s49
      %s52 = sphi 0, %s51
      %s66 = sphi 0, %s52
      %s70 = sphi 0, %s70
      %s72 = sphi 0, %s70
      %s73 = sphi 0, %s72
      %s87 = sphi 0, %s73
      %s91 = sphi 0, %s91
      %s93 = sphi 0, %s91
      %s94 = sphi 0, %s93
      %s108 = sphi 0, %s94
      %s112 = sphi 0, %s112
      %s114 = sphi 0, %s112
      %s115 = sphi 0, %s114
      %s129 = sphi 0, %s115
      %s135 = sphi 0, %s137
      %s138 = sphi 0, %s135
      %s139 = sphi 0, %s138
      %s155 = sphi 0, %s139
    $region4: #{tpu_custom_call.1} parent=1 // loop_header_branch
      %18 = sbr.rel (%p16) target = $region8
    $region5: #{tpu_custom_call.1} parent=1 // loop_body
      %s20 = ssub.s32 %s15, 1
      %s21 = ssub.s32 %s15, 2
      %s22 = sadd.s32 %s15, 1
      %s23 = ssub.s32 %s15, %s22
      %p24 = scmp.eq.s32.totalorder %s23, 0
      %s26 = sadd.s32 %s25, 1
      %s27 = scalar_select %p24, %s25, %s26
      %p30 = pneg %p24
      %p31 = scmp.eq.s32.totalorder %s15, 1
      %p32 = por %p30, %p31
      %p33 = scmp.ne.s32.totalorder %s25, %s28
      %p34 = scmp.eq.s32.totalorder %s15, 0
      %p35 = por %p33, %p34
      %p36 = scmp.ne.s32.totalorder %s25, %s28
      %p37 = scmp.eq.s32.totalorder %s20, 1
      %p38 = por %p36, %p37
      %p39 = scmp.ne.s32.totalorder %s28, %s29
      %p40 = scmp.eq.s32.totalorder %s20, 0
      %p41 = por %p39, %p40
      %p42 = scmp.ne.s32.totalorder %s28, %s29
      %p43 = scmp.eq.s32.totalorder %s21, 1
      %p44 = por %p42, %p43
      %p46 = scmp.ne.s32.totalorder %s29, %s45
      %p47 = scmp.eq.s32.totalorder %s21, 0
      %p48 = por %p46, %p47
      %s50 = sadd.s32 %s49, 1
      %p53 = scmp.eq.s32.totalorder %s15, 1
      %p54 = scmp.ne.s32.totalorder %s49, %s51
      %p55 = scmp.eq.s32.totalorder %s15, 0
      %p56 = por %p54, %p55
      %p57 = scmp.ne.s32.totalorder %s49, %s51
      %p58 = scmp.eq.s32.totalorder %s20, 1
      %p59 = por %p57, %p58
      %p60 = scmp.ne.s32.totalorder %s51, %s52
      %p61 = scmp.eq.s32.totalorder %s20, 0
      %p62 = por %p60, %p61
      %p63 = scmp.ne.s32.totalorder %s51, %s52
      %p64 = scmp.eq.s32.totalorder %s21, 1
      %p65 = por %p63, %p64
      %p67 = scmp.ne.s32.totalorder %s52, %s66
      %p68 = scmp.eq.s32.totalorder %s21, 0
      %p69 = por %p67, %p68
      %s71 = sadd.s32 %s70, 1
      %p74 = scmp.eq.s32.totalorder %s15, 1
      %p75 = scmp.ne.s32.totalorder %s70, %s72
      %p76 = scmp.eq.s32.totalorder %s15, 0
      %p77 = por %p75, %p76
      %p78 = scmp.ne.s32.totalorder %s70, %s72
      %p79 = scmp.eq.s32.totalorder %s20, 1
      %p80 = por %p78, %p79
      %p81 = scmp.ne.s32.totalorder %s72, %s73
      %p82 = scmp.eq.s32.totalorder %s20, 0
      %p83 = por %p81, %p82
      %p84 = scmp.ne.s32.totalorder %s72, %s73
      %p85 = scmp.eq.s32.totalorder %s21, 1
      %p86 = por %p84, %p85
      %p88 = scmp.ne.s32.totalorder %s73, %s87
      %p89 = scmp.eq.s32.totalorder %s21, 0
      %p90 = por %p88, %p89
      %s92 = sadd.s32 %s91, 1
      %p95 = scmp.eq.s32.totalorder %s15, 1
      %p96 = scmp.ne.s32.totalorder %s91, %s93
      %p97 = scmp.eq.s32.totalorder %s15, 0
      %p98 = por %p96, %p97
      %p99 = scmp.ne.s32.totalorder %s91, %s93
      %p100 = scmp.eq.s32.totalorder %s20, 1
      %p101 = por %p99, %p100
      %p102 = scmp.ne.s32.totalorder %s93, %s94
      %p103 = scmp.eq.s32.totalorder %s20, 0
      %p104 = por %p102, %p103
      %p105 = scmp.ne.s32.totalorder %s93, %s94
      %p106 = scmp.eq.s32.totalorder %s21, 1
      %p107 = por %p105, %p106
      %p109 = scmp.ne.s32.totalorder %s94, %s108
      %p110 = scmp.eq.s32.totalorder %s21, 0
      %p111 = por %p109, %p110
      %s113 = sadd.s32 %s112, 1
      %p116 = scmp.eq.s32.totalorder %s15, 1
      %p117 = scmp.ne.s32.totalorder %s112, %s114
      %p118 = scmp.eq.s32.totalorder %s15, 0
      %p119 = por %p117, %p118
      %p120 = scmp.ne.s32.totalorder %s112, %s114
      %p121 = scmp.eq.s32.totalorder %s20, 1
      %p122 = por %p120, %p121
      %p123 = scmp.ne.s32.totalorder %s114, %s115
      %p124 = scmp.eq.s32.totalorder %s20, 0
      %p125 = por %p123, %p124
      %p126 = scmp.ne.s32.totalorder %s114, %s115
      %p127 = scmp.eq.s32.totalorder %s21, 1
      %p128 = por %p126, %p127
      %p130 = scmp.ne.s32.totalorder %s115, %s129
      %p131 = scmp.eq.s32.totalorder %s21, 0
      %p132 = por %p130, %p131
      %s133 = ssub.s32 %s15, %s22
      %p134 = scmp.eq.s32.totalorder %s133, 0
      %s136 = sadd.s32 %s135, 1
      %s137 = scalar_select %p134, %s135, %s136
      %p140 = pneg %p134
      %p141 = scmp.eq.s32.totalorder %s15, 1
      %p142 = por %p140, %p141
      %p143 = scmp.ne.s32.totalorder %s135, %s138
      %p144 = scmp.eq.s32.totalorder %s15, 0
      %p145 = por %p143, %p144
      %p146 = scmp.ne.s32.totalorder %s135, %s138
      %p147 = scmp.eq.s32.totalorder %s20, 1
      %p148 = por %p146, %p147
      %p149 = scmp.ne.s32.totalorder %s138, %s139
      %p150 = scmp.eq.s32.totalorder %s20, 0
      %p151 = por %p149, %p150
      %p152 = scmp.ne.s32.totalorder %s138, %s139
      %p153 = scmp.eq.s32.totalorder %s21, 1
      %p154 = por %p152, %p153
      %p156 = scmp.ne.s32.totalorder %s139, %s155
      %p157 = scmp.eq.s32.totalorder %s21, 0
      %p158 = por %p156, %p157
      %p159 = scmp.le.s32.totalorder 1, %s15
      %p160 = scmp.lt.s32.totalorder %s15, 3
      %p161 = pnand %p159, %p160
      %p162 = pneg %p161
      // Predicated region
      $region9: #{tpu_custom_call.1} parent=5 // pred_check
        _
      $region10: #{tpu_custom_call.1} parent=5 // pred_check_branch
        %164 = sbr.rel (%p161) target = $region12
      $region11: #{tpu_custom_call.1} parent=5 // pred_region
        %s165 = ssub.s32 %s15, 1
        // Predicated region
        $region13: #{tpu_custom_call.1} parent=11 // pred_check
          %p166 = pneg %p62
        $region14: #{tpu_custom_call.1} parent=11 // pred_check_branch
          %168 = sbr.rel (%p166) target = $region16
        $region15: #{tpu_custom_call.1} parent=11 // pred_region
          _
        $region16: #{tpu_custom_call.1} parent=11 // pred_fallthru
          _
        // Predicated region
        $region17: #{tpu_custom_call.1} parent=11 // pred_check
          %p169 = pneg %p83
        $region18: #{tpu_custom_call.1} parent=11 // pred_check_branch
          %171 = sbr.rel (%p169) target = $region20
        $region19: #{tpu_custom_call.1} parent=11 // pred_region
          _
        $region20: #{tpu_custom_call.1} parent=11 // pred_fallthru
          _
        // Predicated region
        $region21: #{tpu_custom_call.1} parent=11 // pred_check
          %p172 = pneg %p104
        $region22: #{tpu_custom_call.1} parent=11 // pred_check_branch
          %174 = sbr.rel (%p172) target = $region24
        $region23: #{tpu_custom_call.1} parent=11 // pred_region
          _
        $region24: #{tpu_custom_call.1} parent=11 // pred_fallthru
          _
        // Predicated region
        $region25: #{tpu_custom_call.1} parent=11 // pred_check
          %p175 = pneg %p125
        $region26: #{tpu_custom_call.1} parent=11 // pred_check_branch
          %177 = sbr.rel (%p175) target = $region28
        $region27: #{tpu_custom_call.1} parent=11 // pred_region
          _
        $region28: #{tpu_custom_call.1} parent=11 // pred_fallthru
          _
      $region12: #{tpu_custom_call.1} parent=5 // pred_fallthru
        _
      %p178 = scmp.lt.s32.totalorder %s15, 2
      // Predicated region
      $region29: #{tpu_custom_call.1} parent=5 // pred_check
        %p179 = pneg %p178
      $region30: #{tpu_custom_call.1} parent=5 // pred_check_branch
        %181 = sbr.rel (%p179) target = $region32
      $region31: #{tpu_custom_call.1} parent=5 // pred_region
        // Predicated region
        $region33: #{tpu_custom_call.1} parent=31 // pred_check
          %p182 = pneg %p35
        $region34: #{tpu_custom_call.1} parent=31 // pred_check_branch
          %184 = sbr.rel (%p182) target = $region36
        $region35: #{tpu_custom_call.1} parent=31 // pred_region
          %s185 = smul.u32 4, %s15
          %p186 = scmp.lt.s32.totalorder %s185, 7
          %s187 = scalar_select %p186, %s185, 7
          %s188 = smul.addr %s187, 2
          %s189 = scalar_lea.vmem %s0, %s188
          %s190 = smul.u32 4, %s15
        $region36: #{tpu_custom_call.1} parent=31 // pred_fallthru
          _
      $region32: #{tpu_custom_call.1} parent=5 // pred_fallthru
        _
      %p191 = scmp.le.s32.totalorder 1, %s15
      %p192 = scmp.lt.s32.totalorder %s15, 3
      %p193 = pnand %p191, %p192
      %p194 = pneg %p193
      // Predicated region
      $region37: #{tpu_custom_call.1} parent=5 // pred_check
        _
      $region38: #{tpu_custom_call.1} parent=5 // pred_check_branch
        %196 = sbr.rel (%p193) target = $region40
      $region39: #{tpu_custom_call.1} parent=5 // pred_region
        %s197 = ssub.s32 %s15, 1
        %s198 = smul.u32 4, %s20
        %p199 = scmp.lt.s32.totalorder %s198, 7
        %s200 = scalar_select %p199, %s198, 7
        %s201 = smul.addr %s200, 2
        %s202 = scalar_lea.vmem %s0, %s201
        %p203 = pneg %p41
        %p204 = pneg %p38
        %p205 = pneg %p62
        %p206 = pneg %p59
        %p207 = pneg %p83
        %p208 = pneg %p80
        %p209 = pneg %p104
        %p210 = pneg %p101
        %p211 = pneg %p125
        %p212 = pneg %p122
        %p213 = pneg %p151
        %p214 = pneg %p148
        %s215 = sand.u32 %s138, 1
        %s216 = scalar_lea.sflag [#allocation4], %s215
        %s217 = sand.u32 %s138, 1
        %s218 = smul.addr %s217, 4
        %s219 = scalar_lea.vmem [#allocation3], %s218
        %s220 = smul.u32 4, %s20
        %p221 = scmp.lt.s32.totalorder %s220, 7
        %s222 = scalar_select %p221, %s220, 7
        %s223 = smul.addr %s222, 2
        %s224 = scalar_lea.vmem %s0, %s223
        %s225 = smul.u32 4, %s20
        %s226 = smul.u32 4, %s20
        %v227 = vld [vmem:[%s1] sm:$0xff]
        %v228 = vld [vmem:[%s1 + $0x8] sm:$0xff]
        %v229 = vld [vmem:[%s1 + $0x10] sm:$0xff]
        %v230 = vld [vmem:[%s1 + $0x18] sm:$0xff]
        %232 = vset.pattern.permute.xlu0 0
        %233 = vperm.xlu0 %232, %v227
        %v234 = vpop.permute.xlu0 %233
        %237 = vset.pattern.permute.xlu0 0
        %238 = vperm.xlu0 %237, %v228
        %v239 = vpop.permute.xlu0 %238
        %242 = vset.pattern.permute.xlu0 0
        %243 = vperm.xlu0 %242, %v229
        %v244 = vpop.permute.xlu0 %243
        %247 = vset.pattern.permute.xlu0 0
        %248 = vperm.xlu0 %247, %v230
        %v249 = vpop.permute.xlu0 %248
        %251 = vset.pattern.permute.xlu0 1
        %252 = vperm.xlu0 %251, %v227
        %v253 = vpop.permute.xlu0 %252
        %255 = vset.pattern.permute.xlu0 1
        %256 = vperm.xlu0 %255, %v228
        %v257 = vpop.permute.xlu0 %256
        %259 = vset.pattern.permute.xlu0 1
        %260 = vperm.xlu0 %259, %v229
        %v261 = vpop.permute.xlu0 %260
        %263 = vset.pattern.permute.xlu0 1
        %264 = vperm.xlu0 %263, %v230
        %v265 = vpop.permute.xlu0 %264
        %v267 = vld [vmem:[%s2] sm:$0xff]
        %v268 = vld [vmem:[%s2 + $0x8] sm:$0xff]
        %v269 = vld [vmem:[%s2 + $0x10] sm:$0xff]
        %v270 = vld [vmem:[%s2 + $0x18] sm:$0xff]
        %272 = vset.pattern.permute.xlu0 0
        %273 = vperm.xlu0 %272, %v267
        %v274 = vpop.permute.xlu0 %273
        %277 = vset.pattern.permute.xlu0 0
        %278 = vperm.xlu0 %277, %v268
        %v279 = vpop.permute.xlu0 %278
        %282 = vset.pattern.permute.xlu0 0
        %283 = vperm.xlu0 %282, %v269
        %v284 = vpop.permute.xlu0 %283
        %287 = vset.pattern.permute.xlu0 0
        %288 = vperm.xlu0 %287, %v270
        %v289 = vpop.permute.xlu0 %288
        %v291 = vld [vmem:[%s3] sm:$0xff]
        %v292 = vld [vmem:[%s3 + $0x8] sm:$0xff]
        %v293 = vld [vmem:[%s3 + $0x10] sm:$0xff]
        %v294 = vld [vmem:[%s3 + $0x18] sm:$0xff]
        %296 = vset.pattern.permute.xlu0 0
        %297 = vperm.xlu0 %296, %v291
        %v298 = vpop.permute.xlu0 %297
        %301 = vset.pattern.permute.xlu0 0
        %302 = vperm.xlu0 %301, %v292
        %v303 = vpop.permute.xlu0 %302
        %306 = vset.pattern.permute.xlu0 0
        %307 = vperm.xlu0 %306, %v293
        %v308 = vpop.permute.xlu0 %307
        %311 = vset.pattern.permute.xlu0 0
        %312 = vperm.xlu0 %311, %v294
        %v313 = vpop.permute.xlu0 %312
        %s315 = sld [smem:[#allocation2]]
        %v316 = vld [vmem:[%s224] ss:$2 sm:$0xf]
        %s317 = scalar_lea.vmem %s224, 1
        %v318 = vld [vmem:[%s317] ss:$2 sm:$0xf]
        %v320 = vperm.slane %v316, 0
        %v321 = vperm.slane %v316, 1
        %v322 = vperm.slane %v316, 2
        %v323 = vperm.slane %v316, 3
        %v328 = vmul.f32 %v234, %v320
        %v329 = vmul.f32 %v234, %v321
        %v330 = vmul.f32 %v234, %v322
        %v331 = vmul.f32 %v234, %v323
        %v332 = vmul.f32 %v239, %v320
        %v333 = vmul.f32 %v239, %v321
        %v334 = vmul.f32 %v239, %v322
        %v335 = vmul.f32 %v239, %v323
        %v336 = vmul.f32 %v244, %v320
        %v337 = vmul.f32 %v244, %v321
        %v338 = vmul.f32 %v244, %v322
        %v339 = vmul.f32 %v244, %v323
        %v340 = vmul.f32 %v249, %v320
        %v341 = vmul.f32 %v249, %v321
        %v342 = vmul.f32 %v249, %v322
        %v343 = vmul.f32 %v249, %v323
        %v345 = vperm.slane %v318, 0
        %v346 = vperm.slane %v318, 1
        %v347 = vperm.slane %v318, 2
        %v348 = vperm.slane %v318, 3
        %v353 = vmul.f32 %v253, %v345
        %v354 = vmul.f32 %v253, %v346
        %v355 = vmul.f32 %v253, %v347
        %v356 = vmul.f32 %v253, %v348
        %v357 = vmul.f32 %v257, %v345
        %v358 = vmul.f32 %v257, %v346
        %v359 = vmul.f32 %v257, %v347
        %v360 = vmul.f32 %v257, %v348
        %v361 = vmul.f32 %v261, %v345
        %v362 = vmul.f32 %v261, %v346
        %v363 = vmul.f32 %v261, %v347
        %v364 = vmul.f32 %v261, %v348
        %v365 = vmul.f32 %v265, %v345
        %v366 = vmul.f32 %v265, %v346
        %v367 = vmul.f32 %v265, %v347
        %v368 = vmul.f32 %v265, %v348
        %v369 = vadd.f32 %v328, %v353
        %v370 = vadd.f32 %v329, %v354
        %v371 = vadd.f32 %v330, %v355
        %v372 = vadd.f32 %v331, %v356
        %v373 = vadd.f32 %v332, %v357
        %v374 = vadd.f32 %v333, %v358
        %v375 = vadd.f32 %v334, %v359
        %v376 = vadd.f32 %v335, %v360
        %v377 = vadd.f32 %v336, %v361
        %v378 = vadd.f32 %v337, %v362
        %v379 = vadd.f32 %v338, %v363
        %v380 = vadd.f32 %v339, %v364
        %v381 = vadd.f32 %v340, %v365
        %v382 = vadd.f32 %v341, %v366
        %v383 = vadd.f32 %v342, %v367
        %v384 = vadd.f32 %v343, %v368
        %v385 = vadd.f32 %v369, %v274
        %v386 = vadd.f32 %v370, %v274
        %v387 = vadd.f32 %v371, %v274
        %v388 = vadd.f32 %v372, %v274
        %v389 = vadd.f32 %v373, %v279
        %v390 = vadd.f32 %v374, %v279
        %v391 = vadd.f32 %v375, %v279
        %v392 = vadd.f32 %v376, %v279
        %v393 = vadd.f32 %v377, %v284
        %v394 = vadd.f32 %v378, %v284
        %v395 = vadd.f32 %v379, %v284
        %v396 = vadd.f32 %v380, %v284
        %v397 = vadd.f32 %v381, %v289
        %v398 = vadd.f32 %v382, %v289
        %v399 = vadd.f32 %v383, %v289
        %v400 = vadd.f32 %v384, %v289
        %v401 = vtanh.pop %v385
        %v402 = vtanh.pop %v386
        %v403 = vtanh.pop %v387
        %v404 = vtanh.pop %v388
        %v405 = vtanh.pop %v389
        %v406 = vtanh.pop %v390
        %v407 = vtanh.pop %v391
        %v408 = vtanh.pop %v392
        %v409 = vtanh.pop %v393
        %v410 = vtanh.pop %v394
        %v411 = vtanh.pop %v395
        %v412 = vtanh.pop %v396
        %v413 = vtanh.pop %v397
        %v414 = vtanh.pop %v398
        %v415 = vtanh.pop %v399
        %v416 = vtanh.pop %v400
        %v417 = vmul.f32 %v401, %v298
        %v418 = vmul.f32 %v402, %v298
        %v419 = vmul.f32 %v403, %v298
        %v420 = vmul.f32 %v404, %v298
        %v421 = vmul.f32 %v405, %v303
        %v422 = vmul.f32 %v406, %v303
        %v423 = vmul.f32 %v407, %v303
        %v424 = vmul.f32 %v408, %v303
        %v425 = vmul.f32 %v409, %v308
        %v426 = vmul.f32 %v410, %v308
        %v427 = vmul.f32 %v411, %v308
        %v428 = vmul.f32 %v412, %v308
        %v429 = vmul.f32 %v413, %v313
        %v430 = vmul.f32 %v414, %v313
        %v431 = vmul.f32 %v415, %v313
        %v432 = vmul.f32 %v416, %v313
        %v433 = vadd.f32 %v417, %v421
        %v434 = vadd.f32 %v433, %v425
        %v435 = vadd.f32 %v434, %v429
        %v436 = vrot.slane %v435, 4
        %v437 = vadd.f32 %v435, %v436
        %v438 = vrot.slane %v437, 2
        %v439 = vadd.f32 %v437, %v438
        %v440 = vrot.slane %v439, 1
        %v441 = vadd.f32 %v439, %v440
        %v442 = vadd.f32 %v418, %v422
        %v443 = vadd.f32 %v442, %v426
        %v444 = vadd.f32 %v443, %v430
        %v445 = vrot.slane %v444, 4
        %v446 = vadd.f32 %v444, %v445
        %v447 = vrot.slane %v446, 2
        %v448 = vadd.f32 %v446, %v447
        %v449 = vrot.slane %v448, 1
        %v450 = vadd.f32 %v448, %v449
        %v451 = vadd.f32 %v419, %v423
        %v452 = vadd.f32 %v451, %v427
        %v453 = vadd.f32 %v452, %v431
        %v454 = vrot.slane %v453, 4
        %v455 = vadd.f32 %v453, %v454
        %v456 = vrot.slane %v455, 2
        %v457 = vadd.f32 %v455, %v456
        %v458 = vrot.slane %v457, 1
        %v459 = vadd.f32 %v457, %v458
        %v460 = vadd.f32 %v420, %v424
        %v461 = vadd.f32 %v460, %v428
        %v462 = vadd.f32 %v461, %v432
        %v463 = vrot.slane %v462, 4
        %v464 = vadd.f32 %v462, %v463
        %v465 = vrot.slane %v464, 2
        %v466 = vadd.f32 %v464, %v465
        %v467 = vrot.slane %v466, 1
        %v468 = vadd.f32 %v466, %v467
        %v469 = vstv %s315
        %v470 = vadd.f32 %v441, %v469
        %v471 = vadd.f32 %v450, %v469
        %v472 = vadd.f32 %v459, %v469
        %v473 = vadd.f32 %v468, %v469
        %v478 = vrot.slane %v471, 7
        %v479 = vrot.slane %v472, 6
        %v480 = vrot.slane %v473, 5
        %vm481 = vcmask 1040384
        %v482 = vsel %vm481, %v470, %v478
        %vm483 = vcmask 1042434
        %v484 = vsel %vm483, %v479, %v480
        %vm485 = vcmask 1041408
        %v486 = vsel %vm485, %v482, %v484
        %v488 = vlaneseq
        %vm489 = vcmp.ge.s32.totalorder %v488, 0
        %vm490 = vcmp.lt.s32.totalorder %v488, 512
        %vm491 = vmand %vm489, %vm490
        %492 = vst.msk [vmem:[%s219] sm:$0xf] %vm491, %v486
        %s493 = sand.u32 %s138, 1
        %s494 = scalar_lea.sflag [#allocation4], %s493
        %s495 = sand.u32 %s138, 1
        %s496 = smul.addr %s495, 4
        %s497 = scalar_lea.vmem [#allocation3], %s496
        // Predicated region
        $region41: #{tpu_custom_call.1} parent=39 // pred_check
          %p498 = pneg %p148
        $region42: #{tpu_custom_call.1} parent=39 // pred_check_branch
          %500 = sbr.rel (%p498) target = $region44
        $region43: #{tpu_custom_call.1} parent=39 // pred_region
          %s501 = smul.u32 4, %s20
          %503 = vsyncadd %s494, 0
          %s504 = scalar_lea.hbm %s5, %s501
          %s506 = sshll.u32 %s497, 4
          %s507 = int_to_ptr.vmem [resolvable:$true] %s506
          %s508 = sshll.u32 %s504, 4
          %s509 = int_to_ptr.hbm [resolvable:$true] %s508
          %511 = dma.vmem_to_hbm [thread:$0]  %s507, 64, %s509, %s494
        $region44: #{tpu_custom_call.1} parent=39 // pred_fallthru
          _
      $region40: #{tpu_custom_call.1} parent=5 // pred_fallthru
        _
      %p512 = scmp.le.s32.totalorder 2, %s15
      // Predicated region
      $region45: #{tpu_custom_call.1} parent=5 // pred_check
        %p513 = pneg %p512
      $region46: #{tpu_custom_call.1} parent=5 // pred_check_branch
        %515 = sbr.rel (%p513) target = $region48
      $region47: #{tpu_custom_call.1} parent=5 // pred_region
        %s516 = ssub.s32 %s15, 2
        // Predicated region
        $region49: #{tpu_custom_call.1} parent=47 // pred_check
          %p517 = pneg %p154
        $region50: #{tpu_custom_call.1} parent=47 // pred_check_branch
          %519 = sbr.rel (%p517) target = $region52
        $region51: #{tpu_custom_call.1} parent=47 // pred_region
          %s520 = sand.u32 %s139, 1
          %s521 = scalar_lea.sflag [#allocation4], %s520
          %s522 = sand.u32 %s139, 1
          %s523 = smul.addr %s522, 4
          %s524 = scalar_lea.vmem [#allocation3], %s523
          %526 = dma.done %s521, 64
        $region52: #{tpu_custom_call.1} parent=47 // pred_fallthru
          _
      $region48: #{tpu_custom_call.1} parent=5 // pred_fallthru
        _
    $region6: #{tpu_custom_call.1} parent=1 // loop_footer
      %s19 = sadd.s32 1, %s15
    $region7: #{tpu_custom_call.1} parent=1 // loop_footer_branch
      %14 = sbr.rel target = $region3
    $region8: #{tpu_custom_call.1} parent=1 // loop_exit
      _
    %527 = vsyncpa [#allocation4], 1
    %s528 = scalar_lea.sflag [#allocation4], 1
    %529 = vsyncpa %s528, 1

</llo_original>
